<compile_context>
chip_gen: v5e
topology: v5e:2x2
jax: 0.10.0
libtpu: 0.0.40
codegen_flags: <defaults>
</compile_context>

<pallas_src>
import functools

import jax
import jax.numpy as jnp
import numpy as np
from jax import lax
from jax.experimental import pallas as pl
from jax.experimental.pallas import tpu as pltpu


def _gcb_kernel(x_ref, w_ref, b_ref, o_ref, *, H, KH):
    """Fused GlobalConvBlock for one batch element, banded-matmul form.

    x_ref : (1, H + KH - 1, W*Cin)   input, H-padded by PH on each side, flattened (w, ci)
    w_ref : (KH, W*Cin, W*Cout)      folded banded weights (both branches summed)
    b_ref : (H, W*Cout)              folded bias plane (all four conv biases)
    o_ref : (1, H, W*Cout)
    """
    # Initialize the accumulator with the first tap (no zeros + add).
    acc = jnp.dot(x_ref[0, 0:H, :], w_ref[0], preferred_element_type=jnp.float32)
    for dh in range(1, KH):                       # short, statically unrolled tap loop
        acc = acc + jnp.dot(x_ref[0, dh:dh + H, :], w_ref[dh],
                            preferred_element_type=jnp.float32)
    # Single lane-dense store: (H, W*Cout) with W*Cout == 128 -> full-width vst.
    o_ref[0] = (acc + b_ref[...]).astype(o_ref.dtype)


def _fold_params(params, kernel_size, H, W, Cin, Cout):
    """Fold the four tiny conv weights + biases of GlobalConvBlock into
    KH banded (W*Cin, W*Cout) matrices and one (H, W*Cout) bias plane.

    out[n,h,w,co] = sum_dh sum_{ws,ci} x_pad[n, h+dh, ws, ci] * WBIG[dh, ws*Cin+ci, w*Cout+co]
                    + BIAS[h, w*Cout+co]
    which is exactly conv_l2(conv_l1(x)) + conv_r2(conv_r1(x)) with zero 'same' padding.
    """
    KH, KW = kernel_size
    PH, PW = (KH - 1) // 2, (KW - 1) // 2
    hp = lax.Precision.HIGHEST

    wl1, wl2 = params["wl1"], params["wl2"]        # (KH,Cin,Cout), (KW,Cout,Cout)
    wr1, wr2 = params["wr1"], params["wr2"]        # (KW,Cin,Cout), (KH,Cout,Cout)
    bl1, bl2 = params["bl1"][0], params["bl2"][0]  # (Cout,)
    br1, br2 = params["br1"][0], params["br2"][0]

    # band[k, ws, wo] = 1 iff W-tap k connects source column ws to output column wo
    # (ws = wo + k - PW); out-of-range source columns simply have no entry -> this IS
    # the zero padding of the W-direction convolutions.
    ws = jnp.arange(W)[None, :, None]
    wo = jnp.arange(W)[None, None, :]
    kk = jnp.arange(KW)[:, None, None]
    band = (ws - wo + PW == kk).astype(jnp.float32)                    # (KW, W, W)

    # Left branch:  (x conv_H wl1) conv_W wl2   -> per-dh banded matrix
    wl12 = jnp.einsum("dic,kco->dkio", wl1, wl2, precision=hp)         # (KH,KW,Cin,Cout)
    WL = jnp.einsum("dkio,kxw->dxiwo", wl12, band, precision=hp)       # (KH,W,Cin,W,Cout)
    # Right branch: (x conv_W wr1) conv_H wr2   -> per-dh banded matrix
    wr12 = jnp.einsum("kic,dco->dkio", wr1, wr2, precision=hp)         # (KH,KW,Cin,Cout)
    WR = jnp.einsum("dkio,kxw->dxiwo", wr12, band, precision=hp)
    wbig = (WL + WR).reshape(KH, W * Cin, W * Cout)

    # Bias plane (H, W*Cout):
    #  - bl2, br2 applied once everywhere,
    #  - bl1 propagated through conv_l2 (column-dependent near W boundaries),
    #  - br1 propagated through conv_r2 (row-dependent near H boundaries).
    validw = band.sum(axis=1)                                          # (KW, W) in {0,1}
    bl12 = jnp.einsum("c,kco,kw->wo", bl1, wl2, validw, precision=hp)  # (W, Cout)
    hh = jnp.arange(H)[None, :]
    dd = jnp.arange(KH)[:, None]
    validh = ((hh + dd - PH >= 0) & (hh + dd - PH < H)).astype(jnp.float32)  # (KH, H)
    br12 = jnp.einsum("c,dco,dh->ho", br1, wr2, validh, precision=hp)  # (H, Cout)
    bias = (bl12[None, :, :] + bl2[None, None, :]
            + br12[:, None, :] + br2[None, None, :])                   # (H, W, Cout)
    return wbig, bias.reshape(H, W * Cout)


def global_conv_block(x_nchw, params, kernel_size, *, compute_dtype=jnp.float32):
    """GlobalConvBlock forward.  x_nchw: (N, Cin, H, W) -> (N, Cout, H, W).

    For v6e/v7x pass compute_dtype=jnp.bfloat16 (matmul inputs bf16, f32 accumulation);
    default f32 preserves bit-level parity with the f32 conv reference.
    """
    KH, KW = kernel_size
    assert KH % 2 == 1 and KW % 2 == 1, "'same'-style padding assumes odd kernel sizes"
    PH = (KH - 1) // 2
    N, Cin, H, W = x_nchw.shape
    Cout = params["wl1"].shape[-1]
    WCI, WCO = W * Cin, W * Cout
    Hp = H + 2 * PH

    wbig, bias = _fold_params(params, kernel_size, H, W, Cin, Cout)

    # NCHW -> NHWC -> (N, H, W*Cin); zero-pad only along H (the W padding lives inside
    # the banded weights).  Under jit the transpose, reshape and pad fuse into one pass.
    x2 = jnp.transpose(x_nchw, (0, 2, 3, 1)).reshape(N, H, WCI)
    x2 = jnp.pad(x2, ((0, 0), (PH, PH), (0, 0))).astype(compute_dtype)
    wbig = wbig.astype(compute_dtype)

    kernel = functools.partial(_gcb_kernel, H=H, KH=KH)

    grid_spec = pltpu.PrefetchScalarGridSpec(
        num_scalar_prefetch=0,
        grid=(N,),  # parallel over batch; for large images add an H-tile axis with a
                    # (KH-1) halo in the index_map (needed on v7x's 64 MiB VMEM and to
                    # feed both of its TensorCores when N is small).
        in_specs=[
            pl.BlockSpec((1, Hp, WCI), lambda n: (n, 0, 0)),
            pl.BlockSpec((KH, WCI, WCO), lambda n: (0, 0, 0)),   # resident across grid
            pl.BlockSpec((H, WCO), lambda n: (0, 0)),            # resident across grid
        ],
        out_specs=pl.BlockSpec((1, H, WCO), lambda n: (n, 0, 0)),
    )

    out2 = pl.pallas_call(
        kernel,
        out_shape=jax.ShapeDtypeStruct((N, H, WCO), x_nchw.dtype),
        grid_spec=grid_spec,
        compiler_params=pltpu.CompilerParams(dimension_semantics=("parallel",)),
    )(x2, wbig, bias)

    # (N, H, W*Cout) -> (N, H, W, Cout) is a free contiguous reshape; then back to NCHW.
    return jnp.transpose(out2.reshape(N, H, W, Cout), (0, 3, 1, 2))


def init_params(key, in_dim, out_dim, kernel_size):
    """Deterministic re-implementation of the module's init: weight ~ N(0, sqrt(2/n)),
    n = kh * kw * out_channels for that conv; biases zero."""
    KH, KW = kernel_size
    k1, k2, k3, k4 = jax.random.split(key, 4)

    def std(kh, kw, oc):
        return float(np.sqrt(2.0 / (kh * kw * oc)))

    wl1 = jax.random.normal(k1, (KH, in_dim, out_dim), jnp.float32) * std(KH, 1, out_dim)
    wl2 = jax.random.normal(k2, (KW, out_dim, out_dim), jnp.float32) * std(1, KW, out_dim)
    wr1 = jax.random.normal(k3, (KW, in_dim, out_dim), jnp.float32) * std(1, KW, out_dim)
    wr2 = jax.random.normal(k4, (KH, out_dim, out_dim), jnp.float32) * std(KH, 1, out_dim)
    zb = jnp.zeros((1, out_dim), jnp.float32)
    return dict(wl1=wl1, wl2=wl2, wr1=wr1, wr2=wr2, bl1=zb, bl2=zb, br1=zb, br2=zb)


def reference(x_nhwc, params, kernel_size):
    """Pure-JAX reference using lax.conv_general_dilated (mirrors the PyTorch forward)."""
    KH, KW = kernel_size
    PH, PW = (KH - 1) // 2, (KW - 1) // 2

    def conv(x, w_hwio, pad, bias):
        y = lax.conv_general_dilated(
            x, w_hwio, window_strides=(1, 1), padding=pad,
            dimension_numbers=("NHWC", "HWIO", "NHWC"))
        return y + bias[0]

    xl = conv(x_nhwc, params["wl1"][:, None, :, :], ((PH, PH), (0, 0)), params["bl1"])
    xl = conv(xl, params["wl2"][None, :, :, :], ((0, 0), (PW, PW)), params["bl2"])
    xr = conv(x_nhwc, params["wr1"][None, :, :, :], ((0, 0), (PW, PW)), params["br1"])
    xr = conv(xr, params["wr2"][:, None, :, :], ((PH, PH), (0, 0)), params["br2"])
    return xl + xr


if __name__ == "__main__":
    key = jax.random.PRNGKey(0)
    kx, kp, kb = jax.random.split(key, 3)

    N, Cin, H, W = 2, 4, 16, 16            # PyTorch-style NCHW input shape
    Cout = 8
    kernel_size = (7, 7)                   # odd -> 'same' padding, as the module assumes

    x_nchw = jax.random.normal(kx, (N, Cin, H, W), jnp.float32)
    params = init_params(kp, Cin, Cout, kernel_size)

    fwd = jax.jit(functools.partial(global_conv_block, kernel_size=kernel_size))

    out_nchw = fwd(x_nchw, params)
    jax.block_until_ready(out_nchw)

    x_nhwc = jnp.transpose(x_nchw, (0, 2, 3, 1))
    ref_nchw = jnp.transpose(reference(x_nhwc, params, kernel_size), (0, 3, 1, 2))
    np.testing.assert_allclose(np.asarray(out_nchw), np.asarray(ref_nchw),
                               rtol=1e-4, atol=1e-4)

    # Module init has zero biases; run a second check with non-zero biases so the
    # folded bias plane (boundary-dependent terms) is exercised too.
    kb1, kb2, kb3, kb4 = jax.random.split(kb, 4)
    params_b = dict(params)
    params_b["bl1"] = 0.1 * jax.random.normal(kb1, (1, Cout), jnp.float32)
    params_b["bl2"] = 0.1 * jax.random.normal(kb2, (1, Cout), jnp.float32)
    params_b["br1"] = 0.1 * jax.random.normal(kb3, (1, Cout), jnp.float32)
    params_b["br2"] = 0.1 * jax.random.normal(kb4, (1, Cout), jnp.float32)
    out_b = fwd(x_nchw, params_b)
    jax.block_until_ready(out_b)
    ref_b = jnp.transpose(reference(x_nhwc, params_b, kernel_size), (0, 3, 1, 2))
    np.testing.assert_allclose(np.asarray(out_b), np.asarray(ref_b),
                               rtol=1e-4, atol=1e-4)

    print("KERNEL_OK")
</pallas_src>

<mosaic_0001>
module attributes {stable_mosaic.version = 11 : i64} {
  func.func @_gcb_kernel(%arg0: i32, %arg1: memref<1x22x64xf32, #tpu.memory_space<vmem>>, %arg2: memref<7x64x128xf32, #tpu.memory_space<vmem>>, %arg3: memref<16x128xf32, #tpu.memory_space<vmem>>, %arg4: memref<1x16x128xf32, #tpu.memory_space<vmem>>) attributes {dimension_semantics = [#tpu.dimension_semantics<parallel>], iteration_bounds = array<i64: 2>, scalar_prefetch = 0 : i64, scratch_operands = 0 : i64, tpu.core_type = #tpu.core_type<tc>, window_params = [{transform_indices = @transform_0, window_bounds = array<i64: 1, 22, 64>}, {pipeline_mode = #tpu.pipeline_mode<synchronous>, transform_indices = @transform_1, window_bounds = array<i64: 7, 64, 128>}, {pipeline_mode = #tpu.pipeline_mode<synchronous>, transform_indices = @transform_2, window_bounds = array<i64: 16, 128>}, {transform_indices = @transform_3, window_bounds = array<i64: 1, 16, 128>}]} {
    %c0 = arith.constant 0 : index
    %c0_0 = arith.constant 0 : index
    %c0_1 = arith.constant 0 : index
    %0 = vector.load %arg1[%c0, %c0_0, %c0_1] : memref<1x22x64xf32, #tpu.memory_space<vmem>>, vector<1x16x64xf32>
    %1 = vector.shape_cast %0 : vector<1x16x64xf32> to vector<16x64xf32>
    %c0_2 = arith.constant 0 : index
    %c0_3 = arith.constant 0 : index
    %c0_4 = arith.constant 0 : index
    %2 = vector.load %arg2[%c0_2, %c0_3, %c0_4] : memref<7x64x128xf32, #tpu.memory_space<vmem>>, vector<1x64x128xf32>
    %3 = vector.shape_cast %2 : vector<1x64x128xf32> to vector<64x128xf32>
    %cst = arith.constant dense<0.000000e+00> : vector<16x128xf32>
    %4 = tpu.matmul %1, %3, %cst {dimension_numbers = #tpu.dot_dimension_numbers<[1], [0], [0], [1], [0, 0, 1, 1], [], []>} : vector<16x64xf32>, vector<64x128xf32>, vector<16x128xf32> -> vector<16x128xf32>
    %c0_5 = arith.constant 0 : index
    %c1 = arith.constant 1 : index
    %c0_6 = arith.constant 0 : index
    %5 = vector.load %arg1[%c0_5, %c1, %c0_6] : memref<1x22x64xf32, #tpu.memory_space<vmem>>, vector<1x16x64xf32>
    %6 = vector.shape_cast %5 : vector<1x16x64xf32> to vector<16x64xf32>
    %c1_7 = arith.constant 1 : index
    %c0_8 = arith.constant 0 : index
    %c0_9 = arith.constant 0 : index
    %7 = vector.load %arg2[%c1_7, %c0_8, %c0_9] : memref<7x64x128xf32, #tpu.memory_space<vmem>>, vector<1x64x128xf32>
    %8 = vector.shape_cast %7 : vector<1x64x128xf32> to vector<64x128xf32>
    %cst_10 = arith.constant dense<0.000000e+00> : vector<16x128xf32>
    %9 = tpu.matmul %6, %8, %cst_10 {dimension_numbers = #tpu.dot_dimension_numbers<[1], [0], [0], [1], [0, 0, 1, 1], [], []>} : vector<16x64xf32>, vector<64x128xf32>, vector<16x128xf32> -> vector<16x128xf32>
    %10 = arith.addf %4, %9 : vector<16x128xf32>
    %c0_11 = arith.constant 0 : index
    %c2 = arith.constant 2 : index
    %c0_12 = arith.constant 0 : index
    %11 = vector.load %arg1[%c0_11, %c2, %c0_12] : memref<1x22x64xf32, #tpu.memory_space<vmem>>, vector<1x16x64xf32>
    %12 = vector.shape_cast %11 : vector<1x16x64xf32> to vector<16x64xf32>
    %c2_13 = arith.constant 2 : index
    %c0_14 = arith.constant 0 : index
    %c0_15 = arith.constant 0 : index
    %13 = vector.load %arg2[%c2_13, %c0_14, %c0_15] : memref<7x64x128xf32, #tpu.memory_space<vmem>>, vector<1x64x128xf32>
    %14 = vector.shape_cast %13 : vector<1x64x128xf32> to vector<64x128xf32>
    %cst_16 = arith.constant dense<0.000000e+00> : vector<16x128xf32>
    %15 = tpu.matmul %12, %14, %cst_16 {dimension_numbers = #tpu.dot_dimension_numbers<[1], [0], [0], [1], [0, 0, 1, 1], [], []>} : vector<16x64xf32>, vector<64x128xf32>, vector<16x128xf32> -> vector<16x128xf32>
    %16 = arith.addf %10, %15 : vector<16x128xf32>
    %c0_17 = arith.constant 0 : index
    %c3 = arith.constant 3 : index
    %c0_18 = arith.constant 0 : index
    %17 = vector.load %arg1[%c0_17, %c3, %c0_18] : memref<1x22x64xf32, #tpu.memory_space<vmem>>, vector<1x16x64xf32>
    %18 = vector.shape_cast %17 : vector<1x16x64xf32> to vector<16x64xf32>
    %c3_19 = arith.constant 3 : index
    %c0_20 = arith.constant 0 : index
    %c0_21 = arith.constant 0 : index
    %19 = vector.load %arg2[%c3_19, %c0_20, %c0_21] : memref<7x64x128xf32, #tpu.memory_space<vmem>>, vector<1x64x128xf32>
    %20 = vector.shape_cast %19 : vector<1x64x128xf32> to vector<64x128xf32>
    %cst_22 = arith.constant dense<0.000000e+00> : vector<16x128xf32>
    %21 = tpu.matmul %18, %20, %cst_22 {dimension_numbers = #tpu.dot_dimension_numbers<[1], [0], [0], [1], [0, 0, 1, 1], [], []>} : vector<16x64xf32>, vector<64x128xf32>, vector<16x128xf32> -> vector<16x128xf32>
    %22 = arith.addf %16, %21 : vector<16x128xf32>
    %c0_23 = arith.constant 0 : index
    %c4 = arith.constant 4 : index
    %c0_24 = arith.constant 0 : index
    %23 = vector.load %arg1[%c0_23, %c4, %c0_24] : memref<1x22x64xf32, #tpu.memory_space<vmem>>, vector<1x16x64xf32>
    %24 = vector.shape_cast %23 : vector<1x16x64xf32> to vector<16x64xf32>
    %c4_25 = arith.constant 4 : index
    %c0_26 = arith.constant 0 : index
    %c0_27 = arith.constant 0 : index
    %25 = vector.load %arg2[%c4_25, %c0_26, %c0_27] : memref<7x64x128xf32, #tpu.memory_space<vmem>>, vector<1x64x128xf32>
    %26 = vector.shape_cast %25 : vector<1x64x128xf32> to vector<64x128xf32>
    %cst_28 = arith.constant dense<0.000000e+00> : vector<16x128xf32>
    %27 = tpu.matmul %24, %26, %cst_28 {dimension_numbers = #tpu.dot_dimension_numbers<[1], [0], [0], [1], [0, 0, 1, 1], [], []>} : vector<16x64xf32>, vector<64x128xf32>, vector<16x128xf32> -> vector<16x128xf32>
    %28 = arith.addf %22, %27 : vector<16x128xf32>
    %c0_29 = arith.constant 0 : index
    %c5 = arith.constant 5 : index
    %c0_30 = arith.constant 0 : index
    %29 = vector.load %arg1[%c0_29, %c5, %c0_30] : memref<1x22x64xf32, #tpu.memory_space<vmem>>, vector<1x16x64xf32>
    %30 = vector.shape_cast %29 : vector<1x16x64xf32> to vector<16x64xf32>
    %c5_31 = arith.constant 5 : index
    %c0_32 = arith.constant 0 : index
    %c0_33 = arith.constant 0 : index
    %31 = vector.load %arg2[%c5_31, %c0_32, %c0_33] : memref<7x64x128xf32, #tpu.memory_space<vmem>>, vector<1x64x128xf32>
    %32 = vector.shape_cast %31 : vector<1x64x128xf32> to vector<64x128xf32>
    %cst_34 = arith.constant dense<0.000000e+00> : vector<16x128xf32>
    %33 = tpu.matmul %30, %32, %cst_34 {dimension_numbers = #tpu.dot_dimension_numbers<[1], [0], [0], [1], [0, 0, 1, 1], [], []>} : vector<16x64xf32>, vector<64x128xf32>, vector<16x128xf32> -> vector<16x128xf32>
    %34 = arith.addf %28, %33 : vector<16x128xf32>
    %c0_35 = arith.constant 0 : index
    %c6 = arith.constant 6 : index
    %c0_36 = arith.constant 0 : index
    %35 = vector.load %arg1[%c0_35, %c6, %c0_36] : memref<1x22x64xf32, #tpu.memory_space<vmem>>, vector<1x16x64xf32>
    %36 = vector.shape_cast %35 : vector<1x16x64xf32> to vector<16x64xf32>
    %c6_37 = arith.constant 6 : index
    %c0_38 = arith.constant 0 : index
    %c0_39 = arith.constant 0 : index
    %37 = vector.load %arg2[%c6_37, %c0_38, %c0_39] : memref<7x64x128xf32, #tpu.memory_space<vmem>>, vector<1x64x128xf32>
    %38 = vector.shape_cast %37 : vector<1x64x128xf32> to vector<64x128xf32>
    %cst_40 = arith.constant dense<0.000000e+00> : vector<16x128xf32>
    %39 = tpu.matmul %36, %38, %cst_40 {dimension_numbers = #tpu.dot_dimension_numbers<[1], [0], [0], [1], [0, 0, 1, 1], [], []>} : vector<16x64xf32>, vector<64x128xf32>, vector<16x128xf32> -> vector<16x128xf32>
    %40 = arith.addf %34, %39 : vector<16x128xf32>
    %c0_41 = arith.constant 0 : index
    %c0_42 = arith.constant 0 : index
    %41 = vector.load %arg3[%c0_41, %c0_42] : memref<16x128xf32, #tpu.memory_space<vmem>>, vector<16x128xf32>
    %42 = arith.addf %40, %41 : vector<16x128xf32>
    %c0_43 = arith.constant 0 : index
    %c0_44 = arith.constant 0 : index
    %c0_45 = arith.constant 0 : index
    %43 = vector.load %arg4[%c0_43, %c0_44, %c0_45] : memref<1x16x128xf32, #tpu.memory_space<vmem>>, vector<1x16x128xf32>
    %44 = vector.shape_cast %43 : vector<1x16x128xf32> to vector<16x128xf32>
    %45 = vector.shape_cast %42 : vector<16x128xf32> to vector<1x16x128xf32>
    tpu.vector_store %arg4[%c0_43, %c0_44, %c0_45], %45 {strides = array<i32>} : memref<1x16x128xf32, #tpu.memory_space<vmem>>, vector<1x16x128xf32>,
    return
  }
  func.func @transform_0(%arg0: i32) -> (i32, i32, i32) {
    %c0_i32 = arith.constant 0 : i32
    %c0_i32_0 = arith.constant 0 : i32
    %c0_i32_1 = arith.constant 0 : i32
    return %arg0, %c0_i32, %c0_i32_0 : i32, i32, i32
  }
  func.func @transform_1(%arg0: i32) -> (i32, i32, i32) {
    %c0_i32 = arith.constant 0 : i32
    %c0_i32_0 = arith.constant 0 : i32
    %c0_i32_1 = arith.constant 0 : i32
    %c0_i32_2 = arith.constant 0 : i32
    return %c0_i32, %c0_i32_0, %c0_i32_1 : i32, i32, i32
  }
  func.func @transform_2(%arg0: i32) -> (i32, i32) {
    %c0_i32 = arith.constant 0 : i32
    %c0_i32_0 = arith.constant 0 : i32
    %c0_i32_1 = arith.constant 0 : i32
    return %c0_i32, %c0_i32_0 : i32, i32
  }
  func.func @transform_3(%arg0: i32) -> (i32, i32, i32) {
    %c0_i32 = arith.constant 0 : i32
    %c0_i32_0 = arith.constant 0 : i32
    %c0_i32_1 = arith.constant 0 : i32
    return %arg0, %c0_i32, %c0_i32_0 : i32, i32, i32
  }
}

</mosaic_0001>

<llo_original>
// kernel: global_conv_block.1
$region0: #{global_conv_block.1}
  #allocation0 [shape = 'u32[]', space=smem, size = 0x4, offset = 0x4, fixed_abs, tag = 'smem constant byte address 0x4 - core index']
  #allocation1 [shape = 'u32[72,128]{1,0:T(1,128)}', space=vmem, size = 0x9000, scoped, tag = 'internal scratch']
  %s0 = inlined_call_operand.vmem [shape: f32[2,22,64], index: 0, kind: input, shape index: {}]
  %s1 = inlined_call_operand.vmem [shape: f32[7,64,128], index: 1, kind: input, shape index: {}]
  %s2 = inlined_call_operand.vmem [shape: f32[16,128], index: 2, kind: input, shape index: {}]
  %s3 = inlined_call_operand.vmem [shape: f32[2,16,128], index: 3, kind: output, shape index: {}]
  %s4 = sld [smem:[#allocation0]]
  $region45: #{global_conv_block.1} parent=0
    _
  %s6 = ssub.s32 1, %s4
  %s7 = scalar_select 0, %s6, %s4
  loop: start=0, step=1, limit=4
  $region2: #{global_conv_block.1} parent=0 // loop_pre_header
    _
  $region3: #{global_conv_block.1} parent=0 // loop_header
    %s9 = sphi 0, %s13
    %p10 = scmp.ge.s32.totalorder %s9, 4
    %s19 = sphi 0, %s21
    %s22 = sphi 0, %s19
    %s23 = sphi 0, %s22
    %s39 = sphi 0, %s23
    %s43 = sphi 0, %s43
    %s45 = sphi 0, %s43
    %s46 = sphi 0, %s45
    %s60 = sphi 0, %s46
    %s64 = sphi 0, %s64
    %s66 = sphi 0, %s64
    %s67 = sphi 0, %s66
    %s81 = sphi 0, %s67
    %s87 = sphi 0, %s89
    %s90 = sphi 0, %s87
    %s91 = sphi 0, %s90
    %s107 = sphi 0, %s91
  $region4: #{global_conv_block.1} parent=0 // loop_header_branch
    %12 = sbr.rel (%p10) target = $region8
  $region5: #{global_conv_block.1} parent=0 // loop_body
    %s14 = ssub.s32 %s9, 1
    %s15 = ssub.s32 %s9, 2
    %s16 = sadd.s32 %s9, 1
    %s17 = ssub.s32 %s9, %s16
    %p18 = scmp.eq.s32.totalorder %s17, 0
    %s20 = sadd.s32 %s19, 1
    %s21 = scalar_select %p18, %s19, %s20
    %p24 = pneg %p18
    %p25 = scmp.eq.s32.totalorder %s9, 1
    %p26 = por %p24, %p25
    %p27 = scmp.ne.s32.totalorder %s19, %s22
    %p28 = scmp.eq.s32.totalorder %s9, 0
    %p29 = por %p27, %p28
    %p30 = scmp.ne.s32.totalorder %s19, %s22
    %p31 = scmp.eq.s32.totalorder %s14, 1
    %p32 = por %p30, %p31
    %p33 = scmp.ne.s32.totalorder %s22, %s23
    %p34 = scmp.eq.s32.totalorder %s14, 0
    %p35 = por %p33, %p34
    %p36 = scmp.ne.s32.totalorder %s22, %s23
    %p37 = scmp.eq.s32.totalorder %s15, 1
    %p38 = por %p36, %p37
    %p40 = scmp.ne.s32.totalorder %s23, %s39
    %p41 = scmp.eq.s32.totalorder %s15, 0
    %p42 = por %p40, %p41
    %s44 = sadd.s32 %s43, 1
    %p47 = scmp.eq.s32.totalorder %s9, 1
    %p48 = scmp.ne.s32.totalorder %s43, %s45
    %p49 = scmp.eq.s32.totalorder %s9, 0
    %p50 = por %p48, %p49
    %p51 = scmp.ne.s32.totalorder %s43, %s45
    %p52 = scmp.eq.s32.totalorder %s14, 1
    %p53 = por %p51, %p52
    %p54 = scmp.ne.s32.totalorder %s45, %s46
    %p55 = scmp.eq.s32.totalorder %s14, 0
    %p56 = por %p54, %p55
    %p57 = scmp.ne.s32.totalorder %s45, %s46
    %p58 = scmp.eq.s32.totalorder %s15, 1
    %p59 = por %p57, %p58
    %p61 = scmp.ne.s32.totalorder %s46, %s60
    %p62 = scmp.eq.s32.totalorder %s15, 0
    %p63 = por %p61, %p62
    %s65 = sadd.s32 %s64, 1
    %p68 = scmp.eq.s32.totalorder %s9, 1
    %p69 = scmp.ne.s32.totalorder %s64, %s66
    %p70 = scmp.eq.s32.totalorder %s9, 0
    %p71 = por %p69, %p70
    %p72 = scmp.ne.s32.totalorder %s64, %s66
    %p73 = scmp.eq.s32.totalorder %s14, 1
    %p74 = por %p72, %p73
    %p75 = scmp.ne.s32.totalorder %s66, %s67
    %p76 = scmp.eq.s32.totalorder %s14, 0
    %p77 = por %p75, %p76
    %p78 = scmp.ne.s32.totalorder %s66, %s67
    %p79 = scmp.eq.s32.totalorder %s15, 1
    %p80 = por %p78, %p79
    %p82 = scmp.ne.s32.totalorder %s67, %s81
    %p83 = scmp.eq.s32.totalorder %s15, 0
    %p84 = por %p82, %p83
    %s85 = ssub.s32 %s9, %s16
    %p86 = scmp.eq.s32.totalorder %s85, 0
    %s88 = sadd.s32 %s87, 1
    %s89 = scalar_select %p86, %s87, %s88
    %p92 = pneg %p86
    %p93 = scmp.eq.s32.totalorder %s9, 1
    %p94 = por %p92, %p93
    %p95 = scmp.ne.s32.totalorder %s87, %s90
    %p96 = scmp.eq.s32.totalorder %s9, 0
    %p97 = por %p95, %p96
    %p98 = scmp.ne.s32.totalorder %s87, %s90
    %p99 = scmp.eq.s32.totalorder %s14, 1
    %p100 = por %p98, %p99
    %p101 = scmp.ne.s32.totalorder %s90, %s91
    %p102 = scmp.eq.s32.totalorder %s14, 0
    %p103 = por %p101, %p102
    %p104 = scmp.ne.s32.totalorder %s90, %s91
    %p105 = scmp.eq.s32.totalorder %s15, 1
    %p106 = por %p104, %p105
    %p108 = scmp.ne.s32.totalorder %s91, %s107
    %p109 = scmp.eq.s32.totalorder %s15, 0
    %p110 = por %p108, %p109
    %p111 = scmp.le.s32.totalorder 1, %s9
    %p112 = scmp.lt.s32.totalorder %s9, 3
    %p113 = pnand %p111, %p112
    %p114 = pneg %p113
    // Predicated region
    $region9: #{global_conv_block.1} parent=5 // pred_check
      _
    $region10: #{global_conv_block.1} parent=5 // pred_check_branch
      %116 = sbr.rel (%p113) target = $region12
    $region11: #{global_conv_block.1} parent=5 // pred_region
      %s117 = ssub.s32 %s9, 1
      // Predicated region
      $region13: #{global_conv_block.1} parent=11 // pred_check
        %p118 = pneg %p56
      $region14: #{global_conv_block.1} parent=11 // pred_check_branch
        %120 = sbr.rel (%p118) target = $region16
      $region15: #{global_conv_block.1} parent=11 // pred_region
        _
      $region16: #{global_conv_block.1} parent=11 // pred_fallthru
        _
      // Predicated region
      $region17: #{global_conv_block.1} parent=11 // pred_check
        %p121 = pneg %p77
      $region18: #{global_conv_block.1} parent=11 // pred_check_branch
        %123 = sbr.rel (%p121) target = $region20
      $region19: #{global_conv_block.1} parent=11 // pred_region
        _
      $region20: #{global_conv_block.1} parent=11 // pred_fallthru
        _
    $region12: #{global_conv_block.1} parent=5 // pred_fallthru
      _
    %p124 = scmp.lt.s32.totalorder %s9, 2
    // Predicated region
    $region21: #{global_conv_block.1} parent=5 // pred_check
      %p125 = pneg %p124
    $region22: #{global_conv_block.1} parent=5 // pred_check_branch
      %127 = sbr.rel (%p125) target = $region24
    $region23: #{global_conv_block.1} parent=5 // pred_region
      // Predicated region
      $region25: #{global_conv_block.1} parent=23 // pred_check
        %p128 = pneg %p29
      $region26: #{global_conv_block.1} parent=23 // pred_check_branch
        %130 = sbr.rel (%p128) target = $region28
      $region27: #{global_conv_block.1} parent=23 // pred_region
        %p131 = scmp.lt.s32.totalorder %s9, 1
        %s132 = scalar_select %p131, %s9, 1
        %s133 = smul.addr %s132, 3
        %s134 = smul.addr %s133, 8
        %s135 = scalar_lea.vmem %s0, %s134
      $region28: #{global_conv_block.1} parent=23 // pred_fallthru
        _
    $region24: #{global_conv_block.1} parent=5 // pred_fallthru
      _
    %p136 = scmp.le.s32.totalorder 1, %s9
    %p137 = scmp.lt.s32.totalorder %s9, 3
    %p138 = pnand %p136, %p137
    %p139 = pneg %p138
    // Predicated region
    $region29: #{global_conv_block.1} parent=5 // pred_check
      _
    $region30: #{global_conv_block.1} parent=5 // pred_check_branch
      %141 = sbr.rel (%p138) target = $region32
    $region31: #{global_conv_block.1} parent=5 // pred_region
      %s142 = ssub.s32 %s9, 1
      %p143 = scmp.lt.s32.totalorder %s14, 1
      %s144 = scalar_select %p143, %s14, 1
      %s145 = smul.addr %s144, 3
      %s146 = smul.addr %s145, 8
      %s147 = scalar_lea.vmem %s0, %s146
      %p148 = pneg %p35
      %p149 = pneg %p32
      %p150 = pneg %p56
      %p151 = pneg %p53
      %p152 = pneg %p77
      %p153 = pneg %p74
      %p154 = pneg %p103
      %p155 = pneg %p100
      %p156 = scmp.lt.s32.totalorder %s14, 1
      %s157 = scalar_select %p156, %s14, 1
      %s158 = smul.addr %s157, 2
      %s159 = smul.addr %s158, 8
      %s160 = scalar_lea.vmem %s3, %s159
      %p161 = scmp.lt.s32.totalorder %s14, 1
      %s162 = scalar_select %p161, %s14, 1
      %s163 = smul.addr %s162, 3
      %s164 = smul.addr %s163, 8
      %s165 = scalar_lea.vmem %s0, %s164
      %p166 = scmp.lt.s32.totalorder %s14, 1
      %s167 = scalar_select %p166, %s14, 1
      %s168 = smul.addr %s167, 2
      %s169 = smul.addr %s168, 8
      %s170 = scalar_lea.vmem %s3, %s169
      %v171 = vld [vmem:[%s165] sm:$0xff]
      %v172 = vld [vmem:[%s165 + $0x8] sm:$0xff]
      %v173 = vld [vmem:[%s1] sm:$0xff]
      %v174 = vld [vmem:[%s1 + $0x8] sm:$0xff]
      %v175 = vld [vmem:[%s1 + $0x10] sm:$0xff]
      %v176 = vld [vmem:[%s1 + $0x18] sm:$0xff]
      %v177 = vld [vmem:[%s1 + $0x20] sm:$0xff]
      %v178 = vld [vmem:[%s1 + $0x28] sm:$0xff]
      %v179 = vld [vmem:[%s1 + $0x30] sm:$0xff]
      %v180 = vld [vmem:[%s1 + $0x38] sm:$0xff]
      %v181 = vld [vmem:[%s165 + $0x1] sm:$0xff]
      %v182 = vld [vmem:[%s165 + $0x9] sm:$0xff]
      %s183 = scalar_lea.vmem %s1, 64
      %v184 = vld [vmem:[%s183] sm:$0xff]
      %v185 = vld [vmem:[%s183 + $0x8] sm:$0xff]
      %v186 = vld [vmem:[%s183 + $0x10] sm:$0xff]
      %v187 = vld [vmem:[%s183 + $0x18] sm:$0xff]
      %v188 = vld [vmem:[%s183 + $0x20] sm:$0xff]
      %v189 = vld [vmem:[%s183 + $0x28] sm:$0xff]
      %v190 = vld [vmem:[%s183 + $0x30] sm:$0xff]
      %v191 = vld [vmem:[%s183 + $0x38] sm:$0xff]
      %vm192 = vcmask 523264
      %v194 = vsel %vm192, %v181, 0
      %v197 = vsel %vm192, %v182, 0
      %199 = vmatpush.msra.mxu0 0.0
      %200 = vmatpush.msra.mxu0 0.0
      %201 = vmatpush.msra.mxu0 0.0
      %202 = vmatpush.msra.mxu0 0.0
      %203 = vmatpush.msra.mxu0 0.0
      %204 = vmatpush.msra.mxu0 0.0
      %205 = vmatpush.msra.mxu0 0.0
      %206 = vmatpush.msra.mxu0 0.0
      %207 = vmatpush.msra.mxu0 %v191
      %208 = vmatpush.msra.mxu0 %v190
      %209 = vmatpush.msra.mxu0 %v189
      %210 = vmatpush.msra.mxu0 %v188
      %211 = vmatpush.msra.mxu0 %v187
      %212 = vmatpush.msra.mxu0 %v186
      %213 = vmatpush.msra.mxu0 %v185
      %214 = vmatpush.msra.mxu0 %v184
      %215 = vmatmul.f32.gmra.mxu0 %v194
      %v216 = vpop.f32.mrf.mxu0
      %v217 = vadd.f32 0.0, %v216
      %218 = vmatmul.f32.gmra.mxu0 %v197
      %v219 = vpop.f32.mrf.mxu0
      %v220 = vadd.f32 0.0, %v219
      %221 = vdwg.mxu0
      %v223 = vsel %vm192, %v171, 0
      %v226 = vsel %vm192, %v172, 0
      %228 = vmatpush.msra.mxu0 0.0
      %229 = vmatpush.msra.mxu0 0.0
      %230 = vmatpush.msra.mxu0 0.0
      %231 = vmatpush.msra.mxu0 0.0
      %232 = vmatpush.msra.mxu0 0.0
      %233 = vmatpush.msra.mxu0 0.0
      %234 = vmatpush.msra.mxu0 0.0
      %235 = vmatpush.msra.mxu0 0.0
      %236 = vmatpush.msra.mxu0 %v180
      %237 = vmatpush.msra.mxu0 %v179
      %238 = vmatpush.msra.mxu0 %v178
      %239 = vmatpush.msra.mxu0 %v177
      %240 = vmatpush.msra.mxu0 %v176
      %241 = vmatpush.msra.mxu0 %v175
      %242 = vmatpush.msra.mxu0 %v174
      %243 = vmatpush.msra.mxu0 %v173
      %244 = vmatmul.f32.gmra.mxu0 %v223
      %v245 = vpop.f32.mrf.mxu0
      %v246 = vadd.f32 %v217, %v245
      %247 = vmatmul.f32.gmra.mxu0 %v226
      %v248 = vpop.f32.mrf.mxu0
      %v249 = vadd.f32 %v220, %v248
      %250 = vdwg.mxu0
      %v251 = vld [vmem:[%s165 + $0x2] sm:$0xff]
      %v252 = vld [vmem:[%s165 + $0xa] sm:$0xff]
      %s253 = scalar_lea.vmem %s1, 128
      %v254 = vld [vmem:[%s253] sm:$0xff]
      %v255 = vld [vmem:[%s253 + $0x8] sm:$0xff]
      %v256 = vld [vmem:[%s253 + $0x10] sm:$0xff]
      %v257 = vld [vmem:[%s253 + $0x18] sm:$0xff]
      %v258 = vld [vmem:[%s253 + $0x20] sm:$0xff]
      %v259 = vld [vmem:[%s253 + $0x28] sm:$0xff]
      %v260 = vld [vmem:[%s253 + $0x30] sm:$0xff]
      %v261 = vld [vmem:[%s253 + $0x38] sm:$0xff]
      %v263 = vsel %vm192, %v251, 0
      %v266 = vsel %vm192, %v252, 0
      %268 = vmatpush.msra.mxu0 0.0
      %269 = vmatpush.msra.mxu0 0.0
      %270 = vmatpush.msra.mxu0 0.0
      %271 = vmatpush.msra.mxu0 0.0
      %272 = vmatpush.msra.mxu0 0.0
      %273 = vmatpush.msra.mxu0 0.0
      %274 = vmatpush.msra.mxu0 0.0
      %275 = vmatpush.msra.mxu0 0.0
      %276 = vmatpush.msra.mxu0 %v261
      %277 = vmatpush.msra.mxu0 %v260
      %278 = vmatpush.msra.mxu0 %v259
      %279 = vmatpush.msra.mxu0 %v258
      %280 = vmatpush.msra.mxu0 %v257
      %281 = vmatpush.msra.mxu0 %v256
      %282 = vmatpush.msra.mxu0 %v255
      %283 = vmatpush.msra.mxu0 %v254
      %284 = vmatmul.f32.gmra.mxu0 %v263
      %v285 = vpop.f32.mrf.mxu0
      %v286 = vadd.f32 0.0, %v285
      %287 = vmatmul.f32.gmra.mxu0 %v266
      %v288 = vpop.f32.mrf.mxu0
      %v289 = vadd.f32 0.0, %v288
      %290 = vdwg.mxu0
      %v291 = vadd.f32 %v246, %v286
      %v292 = vadd.f32 %v249, %v289
      %v293 = vld [vmem:[%s165 + $0x3] sm:$0xff]
      %v294 = vld [vmem:[%s165 + $0xb] sm:$0xff]
      %s295 = scalar_lea.vmem %s1, 192
      %v296 = vld [vmem:[%s295] sm:$0xff]
      %v297 = vld [vmem:[%s295 + $0x8] sm:$0xff]
      %v298 = vld [vmem:[%s295 + $0x10] sm:$0xff]
      %v299 = vld [vmem:[%s295 + $0x18] sm:$0xff]
      %v300 = vld [vmem:[%s295 + $0x20] sm:$0xff]
      %v301 = vld [vmem:[%s295 + $0x28] sm:$0xff]
      %v302 = vld [vmem:[%s295 + $0x30] sm:$0xff]
      %v303 = vld [vmem:[%s295 + $0x38] sm:$0xff]
      %v305 = vsel %vm192, %v293, 0
      %v308 = vsel %vm192, %v294, 0
      %310 = vmatpush.msra.mxu0 0.0
      %311 = vmatpush.msra.mxu0 0.0
      %312 = vmatpush.msra.mxu0 0.0
      %313 = vmatpush.msra.mxu0 0.0
      %314 = vmatpush.msra.mxu0 0.0
      %315 = vmatpush.msra.mxu0 0.0
      %316 = vmatpush.msra.mxu0 0.0
      %317 = vmatpush.msra.mxu0 0.0
      %318 = vmatpush.msra.mxu0 %v303
      %319 = vmatpush.msra.mxu0 %v302
      %320 = vmatpush.msra.mxu0 %v301
      %321 = vmatpush.msra.mxu0 %v300
      %322 = vmatpush.msra.mxu0 %v299
      %323 = vmatpush.msra.mxu0 %v298
      %324 = vmatpush.msra.mxu0 %v297
      %325 = vmatpush.msra.mxu0 %v296
      %326 = vmatmul.f32.gmra.mxu0 %v305
      %v327 = vpop.f32.mrf.mxu0
      %v328 = vadd.f32 0.0, %v327
      %329 = vmatmul.f32.gmra.mxu0 %v308
      %v330 = vpop.f32.mrf.mxu0
      %v331 = vadd.f32 0.0, %v330
      %332 = vdwg.mxu0
      %v333 = vadd.f32 %v291, %v328
      %v334 = vadd.f32 %v292, %v331
      %v335 = vld [vmem:[%s165 + $0x4] sm:$0xff]
      %v336 = vld [vmem:[%s165 + $0xc] sm:$0xff]
      %s337 = scalar_lea.vmem %s1, 256
      %v338 = vld [vmem:[%s337] sm:$0xff]
      %v339 = vld [vmem:[%s337 + $0x8] sm:$0xff]
      %v340 = vld [vmem:[%s337 + $0x10] sm:$0xff]
      %v341 = vld [vmem:[%s337 + $0x18] sm:$0xff]
      %v342 = vld [vmem:[%s337 + $0x20] sm:$0xff]
      %v343 = vld [vmem:[%s337 + $0x28] sm:$0xff]
      %v344 = vld [vmem:[%s337 + $0x30] sm:$0xff]
      %v345 = vld [vmem:[%s337 + $0x38] sm:$0xff]
      %v347 = vsel %vm192, %v335, 0
      %v350 = vsel %vm192, %v336, 0
      %352 = vmatpush.msra.mxu0 0.0
      %353 = vmatpush.msra.mxu0 0.0
      %354 = vmatpush.msra.mxu0 0.0
      %355 = vmatpush.msra.mxu0 0.0
      %356 = vmatpush.msra.mxu0 0.0
      %357 = vmatpush.msra.mxu0 0.0
      %358 = vmatpush.msra.mxu0 0.0
      %359 = vmatpush.msra.mxu0 0.0
      %360 = vmatpush.msra.mxu0 %v345
      %361 = vmatpush.msra.mxu0 %v344
      %362 = vmatpush.msra.mxu0 %v343
      %363 = vmatpush.msra.mxu0 %v342
      %364 = vmatpush.msra.mxu0 %v341
      %365 = vmatpush.msra.mxu0 %v340
      %366 = vmatpush.msra.mxu0 %v339
      %367 = vmatpush.msra.mxu0 %v338
      %368 = vmatmul.f32.gmra.mxu0 %v347
      %v369 = vpop.f32.mrf.mxu0
      %v370 = vadd.f32 0.0, %v369
      %371 = vmatmul.f32.gmra.mxu0 %v350
      %v372 = vpop.f32.mrf.mxu0
      %v373 = vadd.f32 0.0, %v372
      %374 = vdwg.mxu0
      %v375 = vadd.f32 %v333, %v370
      %v376 = vadd.f32 %v334, %v373
      %v377 = vld [vmem:[%s165 + $0x5] sm:$0xff]
      %v378 = vld [vmem:[%s165 + $0xd] sm:$0xff]
      %s379 = scalar_lea.vmem %s1, 320
      %v380 = vld [vmem:[%s379] sm:$0xff]
      %v381 = vld [vmem:[%s379 + $0x8] sm:$0xff]
      %v382 = vld [vmem:[%s379 + $0x10] sm:$0xff]
      %v383 = vld [vmem:[%s379 + $0x18] sm:$0xff]
      %v384 = vld [vmem:[%s379 + $0x20] sm:$0xff]
      %v385 = vld [vmem:[%s379 + $0x28] sm:$0xff]
      %v386 = vld [vmem:[%s379 + $0x30] sm:$0xff]
      %v387 = vld [vmem:[%s379 + $0x38] sm:$0xff]
      %v389 = vsel %vm192, %v377, 0
      %v392 = vsel %vm192, %v378, 0
      %394 = vmatpush.msra.mxu0 0.0
      %395 = vmatpush.msra.mxu0 0.0
      %396 = vmatpush.msra.mxu0 0.0
      %397 = vmatpush.msra.mxu0 0.0
      %398 = vmatpush.msra.mxu0 0.0
      %399 = vmatpush.msra.mxu0 0.0
      %400 = vmatpush.msra.mxu0 0.0
      %401 = vmatpush.msra.mxu0 0.0
      %402 = vmatpush.msra.mxu0 %v387
      %403 = vmatpush.msra.mxu0 %v386
      %404 = vmatpush.msra.mxu0 %v385
      %405 = vmatpush.msra.mxu0 %v384
      %406 = vmatpush.msra.mxu0 %v383
      %407 = vmatpush.msra.mxu0 %v382
      %408 = vmatpush.msra.mxu0 %v381
      %409 = vmatpush.msra.mxu0 %v380
      %410 = vmatmul.f32.gmra.mxu0 %v389
      %v411 = vpop.f32.mrf.mxu0
      %v412 = vadd.f32 0.0, %v411
      %413 = vmatmul.f32.gmra.mxu0 %v392
      %v414 = vpop.f32.mrf.mxu0
      %v415 = vadd.f32 0.0, %v414
      %416 = vdwg.mxu0
      %v417 = vadd.f32 %v375, %v412
      %v418 = vadd.f32 %v376, %v415
      %v419 = vld [vmem:[%s165 + $0x6] sm:$0xff]
      %v420 = vld [vmem:[%s165 + $0xe] sm:$0xff]
      %s421 = scalar_lea.vmem %s1, 384
      %v422 = vld [vmem:[%s421] sm:$0xff]
      %v423 = vld [vmem:[%s421 + $0x8] sm:$0xff]
      %v424 = vld [vmem:[%s421 + $0x10] sm:$0xff]
      %v425 = vld [vmem:[%s421 + $0x18] sm:$0xff]
      %v426 = vld [vmem:[%s421 + $0x20] sm:$0xff]
      %v427 = vld [vmem:[%s421 + $0x28] sm:$0xff]
      %v428 = vld [vmem:[%s421 + $0x30] sm:$0xff]
      %v429 = vld [vmem:[%s421 + $0x38] sm:$0xff]
      %v431 = vsel %vm192, %v419, 0
      %v434 = vsel %vm192, %v420, 0
      %436 = vmatpush.msra.mxu0 0.0
      %437 = vmatpush.msra.mxu0 0.0
      %438 = vmatpush.msra.mxu0 0.0
      %439 = vmatpush.msra.mxu0 0.0
      %440 = vmatpush.msra.mxu0 0.0
      %441 = vmatpush.msra.mxu0 0.0
      %442 = vmatpush.msra.mxu0 0.0
      %443 = vmatpush.msra.mxu0 0.0
      %444 = vmatpush.msra.mxu0 %v429
      %445 = vmatpush.msra.mxu0 %v428
      %446 = vmatpush.msra.mxu0 %v427
      %447 = vmatpush.msra.mxu0 %v426
      %448 = vmatpush.msra.mxu0 %v425
      %449 = vmatpush.msra.mxu0 %v424
      %450 = vmatpush.msra.mxu0 %v423
      %451 = vmatpush.msra.mxu0 %v422
      %452 = vmatmul.f32.gmra.mxu0 %v431
      %v453 = vpop.f32.mrf.mxu0
      %v454 = vadd.f32 0.0, %v453
      %455 = vmatmul.f32.gmra.mxu0 %v434
      %v456 = vpop.f32.mrf.mxu0
      %v457 = vadd.f32 0.0, %v456
      %458 = vdwg.mxu0
      %v459 = vadd.f32 %v417, %v454
      %v460 = vadd.f32 %v418, %v457
      %v461 = vld [vmem:[%s2] sm:$0xff]
      %v462 = vld [vmem:[%s2 + $0x8] sm:$0xff]
      %v463 = vadd.f32 %v459, %v461
      %v464 = vadd.f32 %v460, %v462
      %465 = vst [vmem:[%s170] sm:$0xff] %v463
      %466 = vst [vmem:[%s170 + $0x8] sm:$0xff] %v464
      %p467 = scmp.lt.s32.totalorder %s14, 1
      %s468 = scalar_select %p467, %s14, 1
      %s469 = smul.addr %s468, 2
      %s470 = smul.addr %s469, 8
      %s471 = scalar_lea.vmem %s3, %s470
      // Predicated region
      $region33: #{global_conv_block.1} parent=31 // pred_check
        %p472 = pneg %p100
      $region34: #{global_conv_block.1} parent=31 // pred_check_branch
        %474 = sbr.rel (%p472) target = $region36
      $region35: #{global_conv_block.1} parent=31 // pred_region
        _
      $region36: #{global_conv_block.1} parent=31 // pred_fallthru
        _
    $region32: #{global_conv_block.1} parent=5 // pred_fallthru
      _
    %p475 = scmp.le.s32.totalorder 2, %s9
    // Predicated region
    $region37: #{global_conv_block.1} parent=5 // pred_check
      %p476 = pneg %p475
    $region38: #{global_conv_block.1} parent=5 // pred_check_branch
      %478 = sbr.rel (%p476) target = $region40
    $region39: #{global_conv_block.1} parent=5 // pred_region
      %s479 = ssub.s32 %s9, 2
      // Predicated region
      $region41: #{global_conv_block.1} parent=39 // pred_check
        %p480 = pneg %p106
      $region42: #{global_conv_block.1} parent=39 // pred_check_branch
        %482 = sbr.rel (%p480) target = $region44
      $region43: #{global_conv_block.1} parent=39 // pred_region
        %p483 = scmp.lt.s32.totalorder %s15, 1
        %s484 = scalar_select %p483, %s15, 1
        %s485 = smul.addr %s484, 2
        %s486 = smul.addr %s485, 8
        %s487 = scalar_lea.vmem %s3, %s486
      $region44: #{global_conv_block.1} parent=39 // pred_fallthru
        _
    $region40: #{global_conv_block.1} parent=5 // pred_fallthru
      _
  $region6: #{global_conv_block.1} parent=0 // loop_footer
    %s13 = sadd.s32 1, %s9
  $region7: #{global_conv_block.1} parent=0 // loop_footer_branch
    %8 = sbr.rel target = $region3
  $region8: #{global_conv_block.1} parent=0 // loop_exit
    _

</llo_original>
